<compile_context>
chip_gen: v6e
topology: v6e:2x2x1
jax: 0.10.0
libtpu: 0.0.40
codegen_flags: <defaults>
</compile_context>

<pallas_src>
import jax
import jax.numpy as jnp
from jax import lax
from jax.experimental import pallas as pl
from jax.experimental.pallas import tpu as pltpu


def _choose_tiles(N, CH, W):
    """Pick (TN, CH_TILE) so one input block is ~2 MiB at f32 width.

    2 inputs x 2 pipeline buffers x 2 MiB = 8 MiB of block buffers, comfortably
    inside the 32 MiB scoped-VMEM limit requested below on every generation
    (v5e/v6e: 128 MiB physical, v7x: 64 MiB physical per TensorCore).
    """
    budget = 2 * 1024 * 1024
    row_bytes = W * 4                      # account at f32 width (kernel upcasts)
    slab_bytes = max(CH * row_bytes, 1)    # one image's (C*H, W) slab
    if slab_bytes <= budget:
        ch_tile = CH                       # whole image slab per block
        cap = max(1, min(N, budget // slab_bytes))
        # Prefer a TN that divides N (no masked remainder rows); fall back to the
        # cap (masking handles the remainder) if N's divisors are too small.
        tn = cap
        for d in range(cap, 0, -1):
            if N % d == 0:
                tn = d
                break
        if tn < max(1, cap // 2):
            tn = cap
    else:
        tn = 1                             # one image's CH slab already fills budget
        ch_tile = max(8, (budget // row_bytes) // 8 * 8)
        ch_tile = min(ch_tile, CH)
    return tn, ch_tile


def _make_kernel(N, CH, W, tn, ch_tile, scale, use_approx):
    n_rem = N % tn
    ch_rem = CH % ch_tile

    def kernel(out_ref, lab_ref, o_ref, col_ref):
        # out_ref, lab_ref : (tn, ch_tile, W) VMEM blocks (original dtype)
        # o_ref            : (1, 1) resident scalar accumulator
        # col_ref          : (2, tn, W) VMEM scratch, column-count diff per variant
        nb = pl.program_id(0)              # batch-block index
        cb = pl.program_id(1)              # C*H reduction-tile index (innermost)
        n_nb = pl.num_programs(0)
        n_cb = pl.num_programs(1)

        @pl.when(jnp.logical_and(nb == 0, cb == 0))
        def _():
            o_ref[...] = jnp.zeros_like(o_ref)

        @pl.when(cb == 0)
        def _():
            col_ref[...] = jnp.zeros_like(col_ref)

        out = out_ref[...].astype(jnp.float32)   # cast in-kernel, not in wrapper
        lab = lab_ref[...].astype(jnp.float32)

        if ch_rem != 0:
            ch_idx = lax.broadcasted_iota(jnp.int32, (tn, ch_tile, W), 1)
            ch_valid = (cb * ch_tile + ch_idx) < CH
        else:
            ch_valid = None

        def col_count(x, thr):
            # relu(-relu(-x + thr) + 0.2) == max(0, 0.2 - max(0, thr - x))
            v = jnp.maximum(0.0, 0.2 - jnp.maximum(0.0, thr - x))
            if use_approx:
                g = v * pl.reciprocal(v + 1e-4, approx=True)   # EUP slot
            else:
                g = v / (v + 1e-4)                             # exact (default)
            if ch_valid is not None:
                g = jnp.where(ch_valid, g, 0.0)                # zero padded CH rows
            return jnp.sum(g, axis=1)                          # (tn, W)

        # Column counts are linear in the C,H sum, so accumulating the per-tile
        # (label - out) difference across CH tiles is exact.
        for t, thr in enumerate((0.1, 0.7)):
            col_ref[t] = col_ref[t] + (col_count(lab, thr) - col_count(out, thr))

        @pl.when(cb == n_cb - 1)
        def _():
            if n_rem != 0:
                row = lax.broadcasted_iota(jnp.int32, (tn, W), 0)
                n_valid = (nb * tn + row) < N
            acc = jnp.zeros((1, 1), jnp.float32)
            for t in range(2):
                d = col_ref[t]
                sq = d * d
                if n_rem != 0:
                    sq = jnp.where(n_valid, sq, 0.0)           # drop padded N rows
                acc = acc + jnp.sum(sq, keepdims=True)         # (1, 1)
            o_ref[...] += acc

        @pl.when(jnp.logical_and(nb == n_nb - 1, cb == n_cb - 1))
        def _():
            # mean over (2 variants, true N, W), then / 8000
            o_ref[...] = o_ref[...] * scale

    return kernel


def color_column_loss(out, label, *, tn=None, ch_tile=None,
                      use_approx_reciprocal=False):
    """Pallas equivalent of color_column_loss.forward(out, label). Returns a scalar."""
    assert out.shape == label.shape and out.ndim == 4
    N, C, H, W = out.shape
    CH = C * H

    # Zero-copy merge of the adjacent C,H dims; keep the original dtype (no wrapper
    # astype pass over HBM — the f32 cast happens inside the kernel).
    out3 = out.reshape(N, CH, W)
    lab3 = label.reshape(N, CH, W)

    auto_tn, auto_ch = _choose_tiles(N, CH, W)
    tn = auto_tn if tn is None else int(tn)
    ch_tile = auto_ch if ch_tile is None else int(ch_tile)
    assert 1 <= tn <= N
    assert ch_tile == CH or (1 <= ch_tile <= CH and ch_tile % 8 == 0), (
        "CH tile must be the full C*H extent or a multiple of 8")

    n_blocks = pl.cdiv(N, tn)
    ch_blocks = pl.cdiv(CH, ch_tile)
    scale = 1.0 / (2.0 * N * W * 8000.0)   # true-N normalization (review item 7)

    kernel = _make_kernel(N, CH, W, tn, ch_tile, scale, use_approx_reciprocal)

    res = pl.pallas_call(
        kernel,
        out_shape=jax.ShapeDtypeStruct((1, 1), jnp.float32),
        grid_spec=pltpu.PrefetchScalarGridSpec(
            num_scalar_prefetch=0,
            grid=(n_blocks, ch_blocks),                 # CH reduction axis innermost
            in_specs=[
                pl.BlockSpec((tn, ch_tile, W), lambda n, c: (n, c, 0)),
                pl.BlockSpec((tn, ch_tile, W), lambda n, c: (n, c, 0)),
            ],
            out_specs=pl.BlockSpec((1, 1), lambda n, c: (0, 0)),
            scratch_shapes=[pltpu.VMEM((2, tn, W), jnp.float32)],
        ),
        compiler_params=pltpu.CompilerParams(
            # Both axes feed one resident scalar accumulator -> "arbitrary".
            # TODO(synk): v7x dual-TensorCore split (per-core partial sums over a
            # leading "parallel" axis + wrapper-side add) not implemented; this
            # kernel accumulates on a single TensorCore.
            dimension_semantics=("arbitrary", "arbitrary"),
            vmem_limit_bytes=32 * 1024 * 1024,
        ),
    )(out3, lab3)
    return res[0, 0]


def _reference_loss(out, label):
    # Pure-JAX reference mirroring the PyTorch module exactly.
    def variants(x):
        return jnp.stack(
            [jnp.maximum(0.0, -jnp.maximum(0.0, -x + i) + 0.2) for i in (0.1, 0.7)]
        )  # (2, N, C, H, W)

    lv = variants(label)
    ov = variants(out)
    sub = (lv / (lv + 0.0001)).sum(axis=(2, 3)) - (ov / (ov + 0.0001)).sum(axis=(2, 3))
    return jnp.mean(sub ** 2) / 8000.0


if __name__ == "__main__":
    key = jax.random.PRNGKey(0)
    k1, k2, k3, k4 = jax.random.split(key, 4)

    # Case 1: small NCHW (batch=2, channels=4, spatial=16x16), auto tiling
    # (single grid step, both whole tensors resident in VMEM).
    out = jax.random.uniform(k1, (2, 4, 16, 16), dtype=jnp.float32)
    label = jax.random.uniform(k2, (2, 4, 16, 16), dtype=jnp.float32)
    loss = jax.block_until_ready(color_column_loss(out, label))
    ref = jax.block_until_ready(_reference_loss(out, label))
    assert jnp.allclose(loss, ref, rtol=1e-5, atol=1e-7), (loss, ref)

    # Case 2: forced small tiles on an odd C*H (=20) to exercise the multi-tile
    # CH accumulation scratch and the padded-CH masking path (grid = (2, 3)).
    out2 = jax.random.uniform(k3, (4, 4, 5, 16), dtype=jnp.float32)
    label2 = jax.random.uniform(k4, (4, 4, 5, 16), dtype=jnp.float32)
    loss2 = jax.block_until_ready(color_column_loss(out2, label2, tn=2, ch_tile=8))
    ref2 = jax.block_until_ready(_reference_loss(out2, label2))
    assert jnp.allclose(loss2, ref2, rtol=1e-5, atol=1e-7), (loss2, ref2)

    # Case 3: bf16 inputs read straight from HBM (upcast inside the kernel).
    loss3 = jax.block_until_ready(
        color_column_loss(out.astype(jnp.bfloat16), label.astype(jnp.bfloat16)))
    ref3 = jax.block_until_ready(
        _reference_loss(out.astype(jnp.bfloat16).astype(jnp.float32),
                        label.astype(jnp.bfloat16).astype(jnp.float32)))
    assert jnp.allclose(loss3, ref3, rtol=1e-4, atol=1e-6), (loss3, ref3)

    # Case 4: optional EUP fast path (approximate reciprocal).  Off by default
    # because it perturbs the loss beyond 1e-5; just verify it compiles and runs.
    loss4 = jax.block_until_ready(
        color_column_loss(out, label, use_approx_reciprocal=True))
    assert bool(jnp.isfinite(loss4)), loss4

    print("KERNEL_OK")
</pallas_src>

<mosaic_0001>
module attributes {stable_mosaic.version = 11 : i64} {
  func.func @kernel(%arg0: i32, %arg1: i32, %arg2: memref<2x64x16xf32, #tpu.memory_space<vmem>>, %arg3: memref<2x64x16xf32, #tpu.memory_space<vmem>>, %arg4: memref<1x1xf32, #tpu.memory_space<vmem>>, %arg5: memref<2x2x16xf32, #tpu.memory_space<vmem>>) attributes {dimension_semantics = [#tpu.dimension_semantics<arbitrary>, #tpu.dimension_semantics<arbitrary>], iteration_bounds = array<i64: 1, 1>, scalar_prefetch = 0 : i64, scratch_operands = 1 : i64, tpu.core_type = #tpu.core_type<tc>, window_params = [{transform_indices = @transform_0, window_bounds = array<i64: 2, 64, 16>}, {transform_indices = @transform_1, window_bounds = array<i64: 2, 64, 16>}, {pipeline_mode = #tpu.pipeline_mode<synchronous>, transform_indices = @transform_2, window_bounds = array<i64: 1, 1>}]} {
    %c0_i32 = arith.constant 0 : i32
    %0 = arith.cmpi eq, %arg0, %c0_i32 : i32
    %c0_i32_0 = arith.constant 0 : i32
    %1 = arith.cmpi eq, %arg1, %c0_i32_0 : i32
    %2 = arith.andi %0, %1 : i1
    %3 = arith.extui %2 : i1 to i32
    %c0_i32_1 = arith.constant 0 : i32
    %4 = arith.cmpi ne, %3, %c0_i32_1 : i32
    scf.if %4 {
      %cst_48 = arith.constant 0.000000e+00 : f32
      %80 = vector.broadcast %cst_48 : f32 to vector<1x1xf32>
      %c0_49 = arith.constant 0 : index
      %c0_50 = arith.constant 0 : index
      %81 = vector.load %arg4[%c0_49, %c0_50] : memref<1x1xf32, #tpu.memory_space<vmem>>, vector<1x1xf32>
      tpu.vector_store %arg4[%c0_49, %c0_50], %80 {strides = array<i32>} : memref<1x1xf32, #tpu.memory_space<vmem>>, vector<1x1xf32>,
    } else {
    }
    %c0_i32_2 = arith.constant 0 : i32
    %5 = arith.cmpi eq, %arg1, %c0_i32_2 : i32
    %6 = arith.extui %5 : i1 to i32
    %c0_i32_3 = arith.constant 0 : i32
    %7 = arith.cmpi ne, %6, %c0_i32_3 : i32
    scf.if %7 {
      %cst_48 = arith.constant 0.000000e+00 : f32
      %80 = vector.broadcast %cst_48 : f32 to vector<2x2x16xf32>
      %c0_49 = arith.constant 0 : index
      %c0_50 = arith.constant 0 : index
      %c0_51 = arith.constant 0 : index
      %81 = vector.load %arg5[%c0_49, %c0_50, %c0_51] : memref<2x2x16xf32, #tpu.memory_space<vmem>>, vector<2x2x16xf32>
      tpu.vector_store %arg5[%c0_49, %c0_50, %c0_51], %80 {strides = array<i32>} : memref<2x2x16xf32, #tpu.memory_space<vmem>>, vector<2x2x16xf32>,
    } else {
    }
    %c0 = arith.constant 0 : index
    %c0_4 = arith.constant 0 : index
    %c0_5 = arith.constant 0 : index
    %8 = vector.load %arg2[%c0, %c0_4, %c0_5] : memref<2x64x16xf32, #tpu.memory_space<vmem>>, vector<2x64x16xf32>
    %c0_6 = arith.constant 0 : index
    %c0_7 = arith.constant 0 : index
    %c0_8 = arith.constant 0 : index
    %9 = vector.load %arg3[%c0_6, %c0_7, %c0_8] : memref<2x64x16xf32, #tpu.memory_space<vmem>>, vector<2x64x16xf32>
    %c0_9 = arith.constant 0 : index
    %c0_10 = arith.constant 0 : index
    %c0_11 = arith.constant 0 : index
    %10 = vector.load %arg5[%c0_9, %c0_10, %c0_11] : memref<2x2x16xf32, #tpu.memory_space<vmem>>, vector<1x2x16xf32>
    %11 = vector.shape_cast %10 : vector<1x2x16xf32> to vector<2x16xf32>
    %cst = arith.constant 1.000000e-01 : f32
    %12 = vector.broadcast %cst : f32 to vector<2x64x16xf32>
    %13 = arith.subf %12, %9 : vector<2x64x16xf32>
    %cst_12 = arith.constant 0.000000e+00 : f32
    %14 = vector.broadcast %cst_12 : f32 to vector<2x64x16xf32>
    %15 = arith.maximumf %14, %13 : vector<2x64x16xf32>
    %cst_13 = arith.constant 2.000000e-01 : f32
    %16 = vector.broadcast %cst_13 : f32 to vector<2x64x16xf32>
    %17 = arith.subf %16, %15 : vector<2x64x16xf32>
    %cst_14 = arith.constant 0.000000e+00 : f32
    %18 = vector.broadcast %cst_14 : f32 to vector<2x64x16xf32>
    %19 = arith.maximumf %18, %17 : vector<2x64x16xf32>
    %cst_15 = arith.constant 9.99999974E-5 : f32
    %20 = vector.broadcast %cst_15 : f32 to vector<2x64x16xf32>
    %21 = arith.addf %19, %20 : vector<2x64x16xf32>
    %22 = arith.divf %19, %21 : vector<2x64x16xf32>
    %cst_16 = arith.constant dense<0.000000e+00> : vector<2x16xf32>
    %23 = vector.multi_reduction <add>, %22, %cst_16 [1] : vector<2x64x16xf32> to vector<2x16xf32>
    %cst_17 = arith.constant 1.000000e-01 : f32
    %24 = vector.broadcast %cst_17 : f32 to vector<2x64x16xf32>
    %25 = arith.subf %24, %8 : vector<2x64x16xf32>
    %cst_18 = arith.constant 0.000000e+00 : f32
    %26 = vector.broadcast %cst_18 : f32 to vector<2x64x16xf32>
    %27 = arith.maximumf %26, %25 : vector<2x64x16xf32>
    %cst_19 = arith.constant 2.000000e-01 : f32
    %28 = vector.broadcast %cst_19 : f32 to vector<2x64x16xf32>
    %29 = arith.subf %28, %27 : vector<2x64x16xf32>
    %cst_20 = arith.constant 0.000000e+00 : f32
    %30 = vector.broadcast %cst_20 : f32 to vector<2x64x16xf32>
    %31 = arith.maximumf %30, %29 : vector<2x64x16xf32>
    %cst_21 = arith.constant 9.99999974E-5 : f32
    %32 = vector.broadcast %cst_21 : f32 to vector<2x64x16xf32>
    %33 = arith.addf %31, %32 : vector<2x64x16xf32>
    %34 = arith.divf %31, %33 : vector<2x64x16xf32>
    %cst_22 = arith.constant dense<0.000000e+00> : vector<2x16xf32>
    %35 = vector.multi_reduction <add>, %34, %cst_22 [1] : vector<2x64x16xf32> to vector<2x16xf32>
    %36 = arith.subf %23, %35 : vector<2x16xf32>
    %37 = arith.addf %11, %36 : vector<2x16xf32>
    %c0_23 = arith.constant 0 : index
    %c0_24 = arith.constant 0 : index
    %c0_25 = arith.constant 0 : index
    %38 = vector.load %arg5[%c0_23, %c0_24, %c0_25] : memref<2x2x16xf32, #tpu.memory_space<vmem>>, vector<1x2x16xf32>
    %39 = vector.shape_cast %38 : vector<1x2x16xf32> to vector<2x16xf32>
    %40 = vector.shape_cast %37 : vector<2x16xf32> to vector<1x2x16xf32>
    tpu.vector_store %arg5[%c0_23, %c0_24, %c0_25], %40 {strides = array<i32>} : memref<2x2x16xf32, #tpu.memory_space<vmem>>, vector<1x2x16xf32>,
    %c1 = arith.constant 1 : index
    %c0_26 = arith.constant 0 : index
    %c0_27 = arith.constant 0 : index
    %41 = vector.load %arg5[%c1, %c0_26, %c0_27] : memref<2x2x16xf32, #tpu.memory_space<vmem>>, vector<1x2x16xf32>
    %42 = vector.shape_cast %41 : vector<1x2x16xf32> to vector<2x16xf32>
    %cst_28 = arith.constant 0.699999988 : f32
    %43 = vector.broadcast %cst_28 : f32 to vector<2x64x16xf32>
    %44 = arith.subf %43, %9 : vector<2x64x16xf32>
    %cst_29 = arith.constant 0.000000e+00 : f32
    %45 = vector.broadcast %cst_29 : f32 to vector<2x64x16xf32>
    %46 = arith.maximumf %45, %44 : vector<2x64x16xf32>
    %cst_30 = arith.constant 2.000000e-01 : f32
    %47 = vector.broadcast %cst_30 : f32 to vector<2x64x16xf32>
    %48 = arith.subf %47, %46 : vector<2x64x16xf32>
    %cst_31 = arith.constant 0.000000e+00 : f32
    %49 = vector.broadcast %cst_31 : f32 to vector<2x64x16xf32>
    %50 = arith.maximumf %49, %48 : vector<2x64x16xf32>
    %cst_32 = arith.constant 9.99999974E-5 : f32
    %51 = vector.broadcast %cst_32 : f32 to vector<2x64x16xf32>
    %52 = arith.addf %50, %51 : vector<2x64x16xf32>
    %53 = arith.divf %50, %52 : vector<2x64x16xf32>
    %cst_33 = arith.constant dense<0.000000e+00> : vector<2x16xf32>
    %54 = vector.multi_reduction <add>, %53, %cst_33 [1] : vector<2x64x16xf32> to vector<2x16xf32>
    %cst_34 = arith.constant 0.699999988 : f32
    %55 = vector.broadcast %cst_34 : f32 to vector<2x64x16xf32>
    %56 = arith.subf %55, %8 : vector<2x64x16xf32>
    %cst_35 = arith.constant 0.000000e+00 : f32
    %57 = vector.broadcast %cst_35 : f32 to vector<2x64x16xf32>
    %58 = arith.maximumf %57, %56 : vector<2x64x16xf32>
    %cst_36 = arith.constant 2.000000e-01 : f32
    %59 = vector.broadcast %cst_36 : f32 to vector<2x64x16xf32>
    %60 = arith.subf %59, %58 : vector<2x64x16xf32>
    %cst_37 = arith.constant 0.000000e+00 : f32
    %61 = vector.broadcast %cst_37 : f32 to vector<2x64x16xf32>
    %62 = arith.maximumf %61, %60 : vector<2x64x16xf32>
    %cst_38 = arith.constant 9.99999974E-5 : f32
    %63 = vector.broadcast %cst_38 : f32 to vector<2x64x16xf32>
    %64 = arith.addf %62, %63 : vector<2x64x16xf32>
    %65 = arith.divf %62, %64 : vector<2x64x16xf32>
    %cst_39 = arith.constant dense<0.000000e+00> : vector<2x16xf32>
    %66 = vector.multi_reduction <add>, %65, %cst_39 [1] : vector<2x64x16xf32> to vector<2x16xf32>
    %67 = arith.subf %54, %66 : vector<2x16xf32>
    %68 = arith.addf %42, %67 : vector<2x16xf32>
    %c1_40 = arith.constant 1 : index
    %c0_41 = arith.constant 0 : index
    %c0_42 = arith.constant 0 : index
    %69 = vector.load %arg5[%c1_40, %c0_41, %c0_42] : memref<2x2x16xf32, #tpu.memory_space<vmem>>, vector<1x2x16xf32>
    %70 = vector.shape_cast %69 : vector<1x2x16xf32> to vector<2x16xf32>
    %71 = vector.shape_cast %68 : vector<2x16xf32> to vector<1x2x16xf32>
    tpu.vector_store %arg5[%c1_40, %c0_41, %c0_42], %71 {strides = array<i32>} : memref<2x2x16xf32, #tpu.memory_space<vmem>>, vector<1x2x16xf32>,
    %c0_i32_43 = arith.constant 0 : i32
    %72 = arith.cmpi eq, %arg1, %c0_i32_43 : i32
    %73 = arith.extui %72 : i1 to i32
    %c0_i32_44 = arith.constant 0 : i32
    %74 = arith.cmpi ne, %73, %c0_i32_44 : i32
    scf.if %74 {
      %cst_48 = arith.constant 0.000000e+00 : f32
      %80 = vector.broadcast %cst_48 : f32 to vector<1x1xf32>
      %c0_49 = arith.constant 0 : index
      %c0_50 = arith.constant 0 : index
      %c0_51 = arith.constant 0 : index
      %81 = vector.load %arg5[%c0_49, %c0_50, %c0_51] : memref<2x2x16xf32, #tpu.memory_space<vmem>>, vector<1x2x16xf32>
      %82 = vector.shape_cast %81 : vector<1x2x16xf32> to vector<2x16xf32>
      %83 = arith.mulf %82, %82 : vector<2x16xf32>
      %84 = vector.shape_cast %83 : vector<2x16xf32> to vector<1x2x16xf32>
      %cst_52 = arith.constant dense<0.000000e+00> : vector<1xf32>
      %85 = vector.multi_reduction <add>, %84, %cst_52 [1, 2] : vector<1x2x16xf32> to vector<1xf32>
      %86 = vector.shape_cast %85 : vector<1xf32> to vector<1x1x1xf32>
      %87 = vector.extract %86[0, 0, 0] : f32 from vector<1x1x1xf32>
      %88 = vector.broadcast %87 : f32 to vector<1x1xf32>
      %89 = arith.addf %80, %88 : vector<1x1xf32>
      %c1_53 = arith.constant 1 : index
      %c0_54 = arith.constant 0 : index
      %c0_55 = arith.constant 0 : index
      %90 = vector.load %arg5[%c1_53, %c0_54, %c0_55] : memref<2x2x16xf32, #tpu.memory_space<vmem>>, vector<1x2x16xf32>
      %91 = vector.shape_cast %90 : vector<1x2x16xf32> to vector<2x16xf32>
      %92 = arith.mulf %91, %91 : vector<2x16xf32>
      %93 = vector.shape_cast %92 : vector<2x16xf32> to vector<1x2x16xf32>
      %cst_56 = arith.constant dense<0.000000e+00> : vector<1xf32>
      %94 = vector.multi_reduction <add>, %93, %cst_56 [1, 2] : vector<1x2x16xf32> to vector<1xf32>
      %95 = vector.shape_cast %94 : vector<1xf32> to vector<1x1x1xf32>
      %96 = vector.extract %95[0, 0, 0] : f32 from vector<1x1x1xf32>
      %97 = vector.broadcast %96 : f32 to vector<1x1xf32>
      %98 = arith.addf %89, %97 : vector<1x1xf32>
      %c0_57 = arith.constant 0 : index
      %c0_58 = arith.constant 0 : index
      %99 = vector.load %arg4[%c0_57, %c0_58] : memref<1x1xf32, #tpu.memory_space<vmem>>, vector<1x1xf32>
      %100 = arith.addf %99, %98 : vector<1x1xf32>
      %c0_59 = arith.constant 0 : index
      %c0_60 = arith.constant 0 : index
      %101 = vector.load %arg4[%c0_59, %c0_60] : memref<1x1xf32, #tpu.memory_space<vmem>>, vector<1x1xf32>
      tpu.vector_store %arg4[%c0_59, %c0_60], %100 {strides = array<i32>} : memref<1x1xf32, #tpu.memory_space<vmem>>, vector<1x1xf32>,
    } else {
    }
    %c0_i32_45 = arith.constant 0 : i32
    %75 = arith.cmpi eq, %arg0, %c0_i32_45 : i32
    %c0_i32_46 = arith.constant 0 : i32
    %76 = arith.cmpi eq, %arg1, %c0_i32_46 : i32
    %77 = arith.andi %75, %76 : i1
    %78 = arith.extui %77 : i1 to i32
    %c0_i32_47 = arith.constant 0 : i32
    %79 = arith.cmpi ne, %78, %c0_i32_47 : i32
    scf.if %79 {
      %c0_48 = arith.constant 0 : index
      %c0_49 = arith.constant 0 : index
      %80 = vector.load %arg4[%c0_48, %c0_49] : memref<1x1xf32, #tpu.memory_space<vmem>>, vector<1x1xf32>
      %cst_50 = arith.constant 1.95312509E-6 : f32
      %81 = vector.broadcast %cst_50 : f32 to vector<1x1xf32>
      %82 = arith.mulf %80, %81 : vector<1x1xf32>
      %c0_51 = arith.constant 0 : index
      %c0_52 = arith.constant 0 : index
      %83 = vector.load %arg4[%c0_51, %c0_52] : memref<1x1xf32, #tpu.memory_space<vmem>>, vector<1x1xf32>
      tpu.vector_store %arg4[%c0_51, %c0_52], %82 {strides = array<i32>} : memref<1x1xf32, #tpu.memory_space<vmem>>, vector<1x1xf32>,
    } else {
    }
    return
  }
  func.func @transform_0(%arg0: i32, %arg1: i32) -> (i32, i32, i32) {
    %c0_i32 = arith.constant 0 : i32
    %c0_i32_0 = arith.constant 0 : i32
    return %arg0, %arg1, %c0_i32 : i32, i32, i32
  }
  func.func @transform_1(%arg0: i32, %arg1: i32) -> (i32, i32, i32) {
    %c0_i32 = arith.constant 0 : i32
    %c0_i32_0 = arith.constant 0 : i32
    return %arg0, %arg1, %c0_i32 : i32, i32, i32
  }
  func.func @transform_2(%arg0: i32, %arg1: i32) -> (i32, i32) {
    %c0_i32 = arith.constant 0 : i32
    %c0_i32_0 = arith.constant 0 : i32
    %c0_i32_1 = arith.constant 0 : i32
    return %c0_i32, %c0_i32_0 : i32, i32
  }
}

</mosaic_0001>

<llo_original>
// kernel: tpu_custom_call.1
$region0: #{tpu_custom_call.1}
  #allocation0 [shape = 'u32[]', space=smem, size = 0x4, offset = 0x4, fixed_abs, tag = 'smem constant byte address 0x4 - core index']
  #allocation1 [shape = 'u32[144,128]{1,0:T(1,128)}', space=vmem, size = 0x12000, scoped, tag = 'internal scratch']
  #allocation2 [shape = 'f32[2,2,16]{2,1,0:T(2,128)}', space=vmem, size = 0x800, scoped, tag = 'scratch operand']
  %s0 = inlined_call_operand.vmem [shape: f32[2,64,16], index: 0, kind: input, shape index: {}]
  %s1 = inlined_call_operand.vmem [shape: f32[2,64,16], index: 1, kind: input, shape index: {}]
  %s2 = inlined_call_operand.hbm [shape: f32[1,1], index: 2, kind: output, shape index: {}]
  %s3 = sld [smem:[#allocation0]]
  $region34: #{tpu_custom_call.1} parent=0
    _
  %s5 = ssub.s32 1, %s3
  %s6 = scalar_select 0, %s5, %s3
  $region1: #{tpu_custom_call.1} parent=0
    #allocation3 [shape = 'u8[512]{0}', space=vmem, size = 0x400, scoped, tag = 'output window, operand 0, single buffered']
    #allocation4 [shape = 's32[1]{0}', space=sflag, size = 0x4, scoped, tag = 'scoped memory for tpu_custom_call.1']
    %7 = vsyncpa [#allocation4], 0
    // Predicated region
    $region2: #{tpu_custom_call.1} parent=1 // pred_check
      _
    $region3: #{tpu_custom_call.1} parent=1 // pred_check_branch
      %9 = sbr.rel (0) target = $region5
    $region4: #{tpu_custom_call.1} parent=1 // pred_region
      _
    $region5: #{tpu_custom_call.1} parent=1 // pred_fallthru
      _
    // Predicated region
    $region6: #{tpu_custom_call.1} parent=1 // pred_check
      _
    $region7: #{tpu_custom_call.1} parent=1 // pred_check_branch
      %11 = sbr.rel (0) target = $region9
    $region8: #{tpu_custom_call.1} parent=1 // pred_region
      _
    $region9: #{tpu_custom_call.1} parent=1 // pred_fallthru
      _
    %p12 = scmp.eq.s32.totalorder 0, 0
    %p13 = scmp.eq.s32.totalorder 0, 0
    %p14 = pnand %p12, %p13
    %p15 = pneg %p14
    // Predicated region
    $region10: #{tpu_custom_call.1} parent=1 // pred_check
      _
    $region11: #{tpu_custom_call.1} parent=1 // pred_check_branch
      %17 = sbr.rel (%p14) target = $region13
    $region12: #{tpu_custom_call.1} parent=1 // pred_region
      %vm18 = vcmask 0
      %19 = vst.msk [vmem:[#allocation3] sm:$0x1] %vm18, 0.0
    $region13: #{tpu_custom_call.1} parent=1 // pred_fallthru
      _
    // Predicated region
    $region14: #{tpu_custom_call.1} parent=1 // pred_check
      %p20 = pneg %p13
    $region15: #{tpu_custom_call.1} parent=1 // pred_check_branch
      %22 = sbr.rel (%p20) target = $region17
    $region16: #{tpu_custom_call.1} parent=1 // pred_region
      %vm23 = vcmask 123904
      %24 = vst.msk [vmem:[#allocation2] sm:$0x3] %vm23, 0.0
      %25 = vst.msk [vmem:[#allocation2 + $0x2] sm:$0x3] %vm23, 0.0
    $region17: #{tpu_custom_call.1} parent=1 // pred_fallthru
      _
    %v26 = vld [vmem:[%s0] sm:$0xff]
    %v27 = vld [vmem:[%s0 + $0x8] sm:$0xff]
    %v28 = vld [vmem:[%s0 + $0x10] sm:$0xff]
    %v29 = vld [vmem:[%s0 + $0x18] sm:$0xff]
    %v30 = vld [vmem:[%s0 + $0x20] sm:$0xff]
    %v31 = vld [vmem:[%s0 + $0x28] sm:$0xff]
    %v32 = vld [vmem:[%s0 + $0x30] sm:$0xff]
    %v33 = vld [vmem:[%s0 + $0x38] sm:$0xff]
    %v34 = vld [vmem:[%s0 + $0x40] sm:$0xff]
    %v35 = vld [vmem:[%s0 + $0x48] sm:$0xff]
    %v36 = vld [vmem:[%s0 + $0x50] sm:$0xff]
    %v37 = vld [vmem:[%s0 + $0x58] sm:$0xff]
    %v38 = vld [vmem:[%s0 + $0x60] sm:$0xff]
    %v39 = vld [vmem:[%s0 + $0x68] sm:$0xff]
    %v40 = vld [vmem:[%s0 + $0x70] sm:$0xff]
    %v41 = vld [vmem:[%s0 + $0x78] sm:$0xff]
    %v42 = vld [vmem:[%s1] sm:$0xff]
    %v43 = vld [vmem:[%s1 + $0x8] sm:$0xff]
    %v44 = vld [vmem:[%s1 + $0x10] sm:$0xff]
    %v45 = vld [vmem:[%s1 + $0x18] sm:$0xff]
    %v46 = vld [vmem:[%s1 + $0x20] sm:$0xff]
    %v47 = vld [vmem:[%s1 + $0x28] sm:$0xff]
    %v48 = vld [vmem:[%s1 + $0x30] sm:$0xff]
    %v49 = vld [vmem:[%s1 + $0x38] sm:$0xff]
    %v50 = vld [vmem:[%s1 + $0x40] sm:$0xff]
    %v51 = vld [vmem:[%s1 + $0x48] sm:$0xff]
    %v52 = vld [vmem:[%s1 + $0x50] sm:$0xff]
    %v53 = vld [vmem:[%s1 + $0x58] sm:$0xff]
    %v54 = vld [vmem:[%s1 + $0x60] sm:$0xff]
    %v55 = vld [vmem:[%s1 + $0x68] sm:$0xff]
    %v56 = vld [vmem:[%s1 + $0x70] sm:$0xff]
    %v57 = vld [vmem:[%s1 + $0x78] sm:$0xff]
    %v58 = vld [vmem:[#allocation2] sm:$0x3]
    %v59 = vsub.f32 0.1, %v42
    %v60 = vsub.f32 0.1, %v43
    %v61 = vsub.f32 0.1, %v44
    %v62 = vsub.f32 0.1, %v45
    %v63 = vsub.f32 0.1, %v46
    %v64 = vsub.f32 0.1, %v47
    %v65 = vsub.f32 0.1, %v48
    %v66 = vsub.f32 0.1, %v49
    %v67 = vsub.f32 0.1, %v50
    %v68 = vsub.f32 0.1, %v51
    %v69 = vsub.f32 0.1, %v52
    %v70 = vsub.f32 0.1, %v53
    %v71 = vsub.f32 0.1, %v54
    %v72 = vsub.f32 0.1, %v55
    %v73 = vsub.f32 0.1, %v56
    %v74 = vsub.f32 0.1, %v57
    %v75 = vmax.f32 %v59, 0.0
    %v76 = vmax.f32 %v60, 0.0
    %v77 = vmax.f32 %v61, 0.0
    %v78 = vmax.f32 %v62, 0.0
    %v79 = vmax.f32 %v63, 0.0
    %v80 = vmax.f32 %v64, 0.0
    %v81 = vmax.f32 %v65, 0.0
    %v82 = vmax.f32 %v66, 0.0
    %v83 = vmax.f32 %v67, 0.0
    %v84 = vmax.f32 %v68, 0.0
    %v85 = vmax.f32 %v69, 0.0
    %v86 = vmax.f32 %v70, 0.0
    %v87 = vmax.f32 %v71, 0.0
    %v88 = vmax.f32 %v72, 0.0
    %v89 = vmax.f32 %v73, 0.0
    %v90 = vmax.f32 %v74, 0.0
    %v91 = vsub.f32 0.2, %v75
    %v92 = vsub.f32 0.2, %v76
    %v93 = vsub.f32 0.2, %v77
    %v94 = vsub.f32 0.2, %v78
    %v95 = vsub.f32 0.2, %v79
    %v96 = vsub.f32 0.2, %v80
    %v97 = vsub.f32 0.2, %v81
    %v98 = vsub.f32 0.2, %v82
    %v99 = vsub.f32 0.2, %v83
    %v100 = vsub.f32 0.2, %v84
    %v101 = vsub.f32 0.2, %v85
    %v102 = vsub.f32 0.2, %v86
    %v103 = vsub.f32 0.2, %v87
    %v104 = vsub.f32 0.2, %v88
    %v105 = vsub.f32 0.2, %v89
    %v106 = vsub.f32 0.2, %v90
    %v107 = vmax.f32 %v91, 0.0
    %v108 = vmax.f32 %v92, 0.0
    %v109 = vmax.f32 %v93, 0.0
    %v110 = vmax.f32 %v94, 0.0
    %v111 = vmax.f32 %v95, 0.0
    %v112 = vmax.f32 %v96, 0.0
    %v113 = vmax.f32 %v97, 0.0
    %v114 = vmax.f32 %v98, 0.0
    %v115 = vmax.f32 %v99, 0.0
    %v116 = vmax.f32 %v100, 0.0
    %v117 = vmax.f32 %v101, 0.0
    %v118 = vmax.f32 %v102, 0.0
    %v119 = vmax.f32 %v103, 0.0
    %v120 = vmax.f32 %v104, 0.0
    %v121 = vmax.f32 %v105, 0.0
    %v122 = vmax.f32 %v106, 0.0
    %v123 = vadd.f32 %v107, 0.0001
    %v124 = vadd.f32 %v108, 0.0001
    %v125 = vadd.f32 %v109, 0.0001
    %v126 = vadd.f32 %v110, 0.0001
    %v127 = vadd.f32 %v111, 0.0001
    %v128 = vadd.f32 %v112, 0.0001
    %v129 = vadd.f32 %v113, 0.0001
    %v130 = vadd.f32 %v114, 0.0001
    %v131 = vadd.f32 %v115, 0.0001
    %v132 = vadd.f32 %v116, 0.0001
    %v133 = vadd.f32 %v117, 0.0001
    %v134 = vadd.f32 %v118, 0.0001
    %v135 = vadd.f32 %v119, 0.0001
    %v136 = vadd.f32 %v120, 0.0001
    %v137 = vadd.f32 %v121, 0.0001
    %v138 = vadd.f32 %v122, 0.0001
    %v139 = vrcp.pop %v123
    %v140 = vmul.f32 %v107, %v139
    %v141 = vrcp.pop %v124
    %v142 = vmul.f32 %v108, %v141
    %v143 = vrcp.pop %v125
    %v144 = vmul.f32 %v109, %v143
    %v145 = vrcp.pop %v126
    %v146 = vmul.f32 %v110, %v145
    %v147 = vrcp.pop %v127
    %v148 = vmul.f32 %v111, %v147
    %v149 = vrcp.pop %v128
    %v150 = vmul.f32 %v112, %v149
    %v151 = vrcp.pop %v129
    %v152 = vmul.f32 %v113, %v151
    %v153 = vrcp.pop %v130
    %v154 = vmul.f32 %v114, %v153
    %v155 = vrcp.pop %v131
    %v156 = vmul.f32 %v115, %v155
    %v157 = vrcp.pop %v132
    %v158 = vmul.f32 %v116, %v157
    %v159 = vrcp.pop %v133
    %v160 = vmul.f32 %v117, %v159
    %v161 = vrcp.pop %v134
    %v162 = vmul.f32 %v118, %v161
    %v163 = vrcp.pop %v135
    %v164 = vmul.f32 %v119, %v163
    %v165 = vrcp.pop %v136
    %v166 = vmul.f32 %v120, %v165
    %v167 = vrcp.pop %v137
    %v168 = vmul.f32 %v121, %v167
    %v169 = vrcp.pop %v138
    %v170 = vmul.f32 %v122, %v169
    %vm171 = vcmask 130048
    %v172 = vsel %vm171, %v140, 0.0
    %v173 = vsel %vm171, %v142, 0.0
    %v174 = vadd.f32 %v172, %v173
    %v175 = vsel %vm171, %v144, 0.0
    %v176 = vadd.f32 %v174, %v175
    %v177 = vsel %vm171, %v146, 0.0
    %v178 = vadd.f32 %v176, %v177
    %v179 = vsel %vm171, %v148, 0.0
    %v180 = vadd.f32 %v178, %v179
    %v181 = vsel %vm171, %v150, 0.0
    %v182 = vadd.f32 %v180, %v181
    %v183 = vsel %vm171, %v152, 0.0
    %v184 = vadd.f32 %v182, %v183
    %v185 = vsel %vm171, %v154, 0.0
    %v186 = vadd.f32 %v184, %v185
    %v187 = vrot.slane %v186, 4
    %v188 = vadd.f32 %v186, %v187
    %v189 = vrot.slane %v188, 2
    %v190 = vadd.f32 %v188, %v189
    %v191 = vrot.slane %v190, 1
    %v192 = vadd.f32 %v190, %v191
    %v193 = vsel %vm171, %v156, 0.0
    %v194 = vsel %vm171, %v158, 0.0
    %v195 = vadd.f32 %v193, %v194
    %v196 = vsel %vm171, %v160, 0.0
    %v197 = vadd.f32 %v195, %v196
    %v198 = vsel %vm171, %v162, 0.0
    %v199 = vadd.f32 %v197, %v198
    %v200 = vsel %vm171, %v164, 0.0
    %v201 = vadd.f32 %v199, %v200
    %v202 = vsel %vm171, %v166, 0.0
    %v203 = vadd.f32 %v201, %v202
    %v204 = vsel %vm171, %v168, 0.0
    %v205 = vadd.f32 %v203, %v204
    %v206 = vsel %vm171, %v170, 0.0
    %v207 = vadd.f32 %v205, %v206
    %v208 = vrot.slane %v207, 4
    %v209 = vadd.f32 %v207, %v208
    %v210 = vrot.slane %v209, 2
    %v211 = vadd.f32 %v209, %v210
    %v212 = vrot.slane %v211, 1
    %v213 = vadd.f32 %v211, %v212
    %v214 = vsub.f32 0.1, %v26
    %v215 = vsub.f32 0.1, %v27
    %v216 = vsub.f32 0.1, %v28
    %v217 = vsub.f32 0.1, %v29
    %v218 = vsub.f32 0.1, %v30
    %v219 = vsub.f32 0.1, %v31
    %v220 = vsub.f32 0.1, %v32
    %v221 = vsub.f32 0.1, %v33
    %v222 = vsub.f32 0.1, %v34
    %v223 = vsub.f32 0.1, %v35
    %v224 = vsub.f32 0.1, %v36
    %v225 = vsub.f32 0.1, %v37
    %v226 = vsub.f32 0.1, %v38
    %v227 = vsub.f32 0.1, %v39
    %v228 = vsub.f32 0.1, %v40
    %v229 = vsub.f32 0.1, %v41
    %v230 = vmax.f32 %v214, 0.0
    %v231 = vmax.f32 %v215, 0.0
    %v232 = vmax.f32 %v216, 0.0
    %v233 = vmax.f32 %v217, 0.0
    %v234 = vmax.f32 %v218, 0.0
    %v235 = vmax.f32 %v219, 0.0
    %v236 = vmax.f32 %v220, 0.0
    %v237 = vmax.f32 %v221, 0.0
    %v238 = vmax.f32 %v222, 0.0
    %v239 = vmax.f32 %v223, 0.0
    %v240 = vmax.f32 %v224, 0.0
    %v241 = vmax.f32 %v225, 0.0
    %v242 = vmax.f32 %v226, 0.0
    %v243 = vmax.f32 %v227, 0.0
    %v244 = vmax.f32 %v228, 0.0
    %v245 = vmax.f32 %v229, 0.0
    %v246 = vsub.f32 0.2, %v230
    %v247 = vsub.f32 0.2, %v231
    %v248 = vsub.f32 0.2, %v232
    %v249 = vsub.f32 0.2, %v233
    %v250 = vsub.f32 0.2, %v234
    %v251 = vsub.f32 0.2, %v235
    %v252 = vsub.f32 0.2, %v236
    %v253 = vsub.f32 0.2, %v237
    %v254 = vsub.f32 0.2, %v238
    %v255 = vsub.f32 0.2, %v239
    %v256 = vsub.f32 0.2, %v240
    %v257 = vsub.f32 0.2, %v241
    %v258 = vsub.f32 0.2, %v242
    %v259 = vsub.f32 0.2, %v243
    %v260 = vsub.f32 0.2, %v244
    %v261 = vsub.f32 0.2, %v245
    %v262 = vmax.f32 %v246, 0.0
    %v263 = vmax.f32 %v247, 0.0
    %v264 = vmax.f32 %v248, 0.0
    %v265 = vmax.f32 %v249, 0.0
    %v266 = vmax.f32 %v250, 0.0
    %v267 = vmax.f32 %v251, 0.0
    %v268 = vmax.f32 %v252, 0.0
    %v269 = vmax.f32 %v253, 0.0
    %v270 = vmax.f32 %v254, 0.0
    %v271 = vmax.f32 %v255, 0.0
    %v272 = vmax.f32 %v256, 0.0
    %v273 = vmax.f32 %v257, 0.0
    %v274 = vmax.f32 %v258, 0.0
    %v275 = vmax.f32 %v259, 0.0
    %v276 = vmax.f32 %v260, 0.0
    %v277 = vmax.f32 %v261, 0.0
    %v278 = vadd.f32 %v262, 0.0001
    %v279 = vadd.f32 %v263, 0.0001
    %v280 = vadd.f32 %v264, 0.0001
    %v281 = vadd.f32 %v265, 0.0001
    %v282 = vadd.f32 %v266, 0.0001
    %v283 = vadd.f32 %v267, 0.0001
    %v284 = vadd.f32 %v268, 0.0001
    %v285 = vadd.f32 %v269, 0.0001
    %v286 = vadd.f32 %v270, 0.0001
    %v287 = vadd.f32 %v271, 0.0001
    %v288 = vadd.f32 %v272, 0.0001
    %v289 = vadd.f32 %v273, 0.0001
    %v290 = vadd.f32 %v274, 0.0001
    %v291 = vadd.f32 %v275, 0.0001
    %v292 = vadd.f32 %v276, 0.0001
    %v293 = vadd.f32 %v277, 0.0001
    %v294 = vrcp.pop %v278
    %v295 = vmul.f32 %v262, %v294
    %v296 = vrcp.pop %v279
    %v297 = vmul.f32 %v263, %v296
    %v298 = vrcp.pop %v280
    %v299 = vmul.f32 %v264, %v298
    %v300 = vrcp.pop %v281
    %v301 = vmul.f32 %v265, %v300
    %v302 = vrcp.pop %v282
    %v303 = vmul.f32 %v266, %v302
    %v304 = vrcp.pop %v283
    %v305 = vmul.f32 %v267, %v304
    %v306 = vrcp.pop %v284
    %v307 = vmul.f32 %v268, %v306
    %v308 = vrcp.pop %v285
    %v309 = vmul.f32 %v269, %v308
    %v310 = vrcp.pop %v286
    %v311 = vmul.f32 %v270, %v310
    %v312 = vrcp.pop %v287
    %v313 = vmul.f32 %v271, %v312
    %v314 = vrcp.pop %v288
    %v315 = vmul.f32 %v272, %v314
    %v316 = vrcp.pop %v289
    %v317 = vmul.f32 %v273, %v316
    %v318 = vrcp.pop %v290
    %v319 = vmul.f32 %v274, %v318
    %v320 = vrcp.pop %v291
    %v321 = vmul.f32 %v275, %v320
    %v322 = vrcp.pop %v292
    %v323 = vmul.f32 %v276, %v322
    %v324 = vrcp.pop %v293
    %v325 = vmul.f32 %v277, %v324
    %v326 = vsel %vm171, %v295, 0.0
    %v327 = vsel %vm171, %v297, 0.0
    %v328 = vadd.f32 %v326, %v327
    %v329 = vsel %vm171, %v299, 0.0
    %v330 = vadd.f32 %v328, %v329
    %v331 = vsel %vm171, %v301, 0.0
    %v332 = vadd.f32 %v330, %v331
    %v333 = vsel %vm171, %v303, 0.0
    %v334 = vadd.f32 %v332, %v333
    %v335 = vsel %vm171, %v305, 0.0
    %v336 = vadd.f32 %v334, %v335
    %v337 = vsel %vm171, %v307, 0.0
    %v338 = vadd.f32 %v336, %v337
    %v339 = vsel %vm171, %v309, 0.0
    %v340 = vadd.f32 %v338, %v339
    %v341 = vrot.slane %v340, 4
    %v342 = vadd.f32 %v340, %v341
    %v343 = vrot.slane %v342, 2
    %v344 = vadd.f32 %v342, %v343
    %v345 = vrot.slane %v344, 1
    %v346 = vadd.f32 %v344, %v345
    %v347 = vsel %vm171, %v311, 0.0
    %v348 = vsel %vm171, %v313, 0.0
    %v349 = vadd.f32 %v347, %v348
    %v350 = vsel %vm171, %v315, 0.0
    %v351 = vadd.f32 %v349, %v350
    %v352 = vsel %vm171, %v317, 0.0
    %v353 = vadd.f32 %v351, %v352
    %v354 = vsel %vm171, %v319, 0.0
    %v355 = vadd.f32 %v353, %v354
    %v356 = vsel %vm171, %v321, 0.0
    %v357 = vadd.f32 %v355, %v356
    %v358 = vsel %vm171, %v323, 0.0
    %v359 = vadd.f32 %v357, %v358
    %v360 = vsel %vm171, %v325, 0.0
    %v361 = vadd.f32 %v359, %v360
    %v362 = vrot.slane %v361, 4
    %v363 = vadd.f32 %v361, %v362
    %v364 = vrot.slane %v363, 2
    %v365 = vadd.f32 %v363, %v364
    %v366 = vrot.slane %v365, 1
    %v367 = vadd.f32 %v365, %v366
    %v368 = vsub.f32 %v192, %v346
    %v369 = vsub.f32 %v213, %v367
    %vm372 = vcmask 1041409
    %v373 = vsel %vm372, %v369, %v368
    %v375 = vadd.f32 %v58, %v373
    %vm376 = vcmask 123904
    %377 = vst.msk [vmem:[#allocation2] sm:$0x3] %vm376, %v375
    %s378 = scalar_lea.vmem [#allocation2], 2
    %v379 = vld [vmem:[%s378] sm:$0x3]
    %v380 = vsub.f32 0.7, %v42
    %v381 = vsub.f32 0.7, %v43
    %v382 = vsub.f32 0.7, %v44
    %v383 = vsub.f32 0.7, %v45
    %v384 = vsub.f32 0.7, %v46
    %v385 = vsub.f32 0.7, %v47
    %v386 = vsub.f32 0.7, %v48
    %v387 = vsub.f32 0.7, %v49
    %v388 = vsub.f32 0.7, %v50
    %v389 = vsub.f32 0.7, %v51
    %v390 = vsub.f32 0.7, %v52
    %v391 = vsub.f32 0.7, %v53
    %v392 = vsub.f32 0.7, %v54
    %v393 = vsub.f32 0.7, %v55
    %v394 = vsub.f32 0.7, %v56
    %v395 = vsub.f32 0.7, %v57
    %v396 = vmax.f32 %v380, 0.0
    %v397 = vmax.f32 %v381, 0.0
    %v398 = vmax.f32 %v382, 0.0
    %v399 = vmax.f32 %v383, 0.0
    %v400 = vmax.f32 %v384, 0.0
    %v401 = vmax.f32 %v385, 0.0
    %v402 = vmax.f32 %v386, 0.0
    %v403 = vmax.f32 %v387, 0.0
    %v404 = vmax.f32 %v388, 0.0
    %v405 = vmax.f32 %v389, 0.0
    %v406 = vmax.f32 %v390, 0.0
    %v407 = vmax.f32 %v391, 0.0
    %v408 = vmax.f32 %v392, 0.0
    %v409 = vmax.f32 %v393, 0.0
    %v410 = vmax.f32 %v394, 0.0
    %v411 = vmax.f32 %v395, 0.0
    %v412 = vsub.f32 0.2, %v396
    %v413 = vsub.f32 0.2, %v397
    %v414 = vsub.f32 0.2, %v398
    %v415 = vsub.f32 0.2, %v399
    %v416 = vsub.f32 0.2, %v400
    %v417 = vsub.f32 0.2, %v401
    %v418 = vsub.f32 0.2, %v402
    %v419 = vsub.f32 0.2, %v403
    %v420 = vsub.f32 0.2, %v404
    %v421 = vsub.f32 0.2, %v405
    %v422 = vsub.f32 0.2, %v406
    %v423 = vsub.f32 0.2, %v407
    %v424 = vsub.f32 0.2, %v408
    %v425 = vsub.f32 0.2, %v409
    %v426 = vsub.f32 0.2, %v410
    %v427 = vsub.f32 0.2, %v411
    %v428 = vmax.f32 %v412, 0.0
    %v429 = vmax.f32 %v413, 0.0
    %v430 = vmax.f32 %v414, 0.0
    %v431 = vmax.f32 %v415, 0.0
    %v432 = vmax.f32 %v416, 0.0
    %v433 = vmax.f32 %v417, 0.0
    %v434 = vmax.f32 %v418, 0.0
    %v435 = vmax.f32 %v419, 0.0
    %v436 = vmax.f32 %v420, 0.0
    %v437 = vmax.f32 %v421, 0.0
    %v438 = vmax.f32 %v422, 0.0
    %v439 = vmax.f32 %v423, 0.0
    %v440 = vmax.f32 %v424, 0.0
    %v441 = vmax.f32 %v425, 0.0
    %v442 = vmax.f32 %v426, 0.0
    %v443 = vmax.f32 %v427, 0.0
    %v444 = vadd.f32 %v428, 0.0001
    %v445 = vadd.f32 %v429, 0.0001
    %v446 = vadd.f32 %v430, 0.0001
    %v447 = vadd.f32 %v431, 0.0001
    %v448 = vadd.f32 %v432, 0.0001
    %v449 = vadd.f32 %v433, 0.0001
    %v450 = vadd.f32 %v434, 0.0001
    %v451 = vadd.f32 %v435, 0.0001
    %v452 = vadd.f32 %v436, 0.0001
    %v453 = vadd.f32 %v437, 0.0001
    %v454 = vadd.f32 %v438, 0.0001
    %v455 = vadd.f32 %v439, 0.0001
    %v456 = vadd.f32 %v440, 0.0001
    %v457 = vadd.f32 %v441, 0.0001
    %v458 = vadd.f32 %v442, 0.0001
    %v459 = vadd.f32 %v443, 0.0001
    %v460 = vrcp.pop %v444
    %v461 = vmul.f32 %v428, %v460
    %v462 = vrcp.pop %v445
    %v463 = vmul.f32 %v429, %v462
    %v464 = vrcp.pop %v446
    %v465 = vmul.f32 %v430, %v464
    %v466 = vrcp.pop %v447
    %v467 = vmul.f32 %v431, %v466
    %v468 = vrcp.pop %v448
    %v469 = vmul.f32 %v432, %v468
    %v470 = vrcp.pop %v449
    %v471 = vmul.f32 %v433, %v470
    %v472 = vrcp.pop %v450
    %v473 = vmul.f32 %v434, %v472
    %v474 = vrcp.pop %v451
    %v475 = vmul.f32 %v435, %v474
    %v476 = vrcp.pop %v452
    %v477 = vmul.f32 %v436, %v476
    %v478 = vrcp.pop %v453
    %v479 = vmul.f32 %v437, %v478
    %v480 = vrcp.pop %v454
    %v481 = vmul.f32 %v438, %v480
    %v482 = vrcp.pop %v455
    %v483 = vmul.f32 %v439, %v482
    %v484 = vrcp.pop %v456
    %v485 = vmul.f32 %v440, %v484
    %v486 = vrcp.pop %v457
    %v487 = vmul.f32 %v441, %v486
    %v488 = vrcp.pop %v458
    %v489 = vmul.f32 %v442, %v488
    %v490 = vrcp.pop %v459
    %v491 = vmul.f32 %v443, %v490
    %v492 = vsel %vm171, %v461, 0.0
    %v493 = vsel %vm171, %v463, 0.0
    %v494 = vadd.f32 %v492, %v493
    %v495 = vsel %vm171, %v465, 0.0
    %v496 = vadd.f32 %v494, %v495
    %v497 = vsel %vm171, %v467, 0.0
    %v498 = vadd.f32 %v496, %v497
    %v499 = vsel %vm171, %v469, 0.0
    %v500 = vadd.f32 %v498, %v499
    %v501 = vsel %vm171, %v471, 0.0
    %v502 = vadd.f32 %v500, %v501
    %v503 = vsel %vm171, %v473, 0.0
    %v504 = vadd.f32 %v502, %v503
    %v505 = vsel %vm171, %v475, 0.0
    %v506 = vadd.f32 %v504, %v505
    %v507 = vrot.slane %v506, 4
    %v508 = vadd.f32 %v506, %v507
    %v509 = vrot.slane %v508, 2
    %v510 = vadd.f32 %v508, %v509
    %v511 = vrot.slane %v510, 1
    %v512 = vadd.f32 %v510, %v511
    %v513 = vsel %vm171, %v477, 0.0
    %v514 = vsel %vm171, %v479, 0.0
    %v515 = vadd.f32 %v513, %v514
    %v516 = vsel %vm171, %v481, 0.0
    %v517 = vadd.f32 %v515, %v516
    %v518 = vsel %vm171, %v483, 0.0
    %v519 = vadd.f32 %v517, %v518
    %v520 = vsel %vm171, %v485, 0.0
    %v521 = vadd.f32 %v519, %v520
    %v522 = vsel %vm171, %v487, 0.0
    %v523 = vadd.f32 %v521, %v522
    %v524 = vsel %vm171, %v489, 0.0
    %v525 = vadd.f32 %v523, %v524
    %v526 = vsel %vm171, %v491, 0.0
    %v527 = vadd.f32 %v525, %v526
    %v528 = vrot.slane %v527, 4
    %v529 = vadd.f32 %v527, %v528
    %v530 = vrot.slane %v529, 2
    %v531 = vadd.f32 %v529, %v530
    %v532 = vrot.slane %v531, 1
    %v533 = vadd.f32 %v531, %v532
    %v534 = vsub.f32 0.7, %v26
    %v535 = vsub.f32 0.7, %v27
    %v536 = vsub.f32 0.7, %v28
    %v537 = vsub.f32 0.7, %v29
    %v538 = vsub.f32 0.7, %v30
    %v539 = vsub.f32 0.7, %v31
    %v540 = vsub.f32 0.7, %v32
    %v541 = vsub.f32 0.7, %v33
    %v542 = vsub.f32 0.7, %v34
    %v543 = vsub.f32 0.7, %v35
    %v544 = vsub.f32 0.7, %v36
    %v545 = vsub.f32 0.7, %v37
    %v546 = vsub.f32 0.7, %v38
    %v547 = vsub.f32 0.7, %v39
    %v548 = vsub.f32 0.7, %v40
    %v549 = vsub.f32 0.7, %v41
    %v550 = vmax.f32 %v534, 0.0
    %v551 = vmax.f32 %v535, 0.0
    %v552 = vmax.f32 %v536, 0.0
    %v553 = vmax.f32 %v537, 0.0
    %v554 = vmax.f32 %v538, 0.0
    %v555 = vmax.f32 %v539, 0.0
    %v556 = vmax.f32 %v540, 0.0
    %v557 = vmax.f32 %v541, 0.0
    %v558 = vmax.f32 %v542, 0.0
    %v559 = vmax.f32 %v543, 0.0
    %v560 = vmax.f32 %v544, 0.0
    %v561 = vmax.f32 %v545, 0.0
    %v562 = vmax.f32 %v546, 0.0
    %v563 = vmax.f32 %v547, 0.0
    %v564 = vmax.f32 %v548, 0.0
    %v565 = vmax.f32 %v549, 0.0
    %v566 = vsub.f32 0.2, %v550
    %v567 = vsub.f32 0.2, %v551
    %v568 = vsub.f32 0.2, %v552
    %v569 = vsub.f32 0.2, %v553
    %v570 = vsub.f32 0.2, %v554
    %v571 = vsub.f32 0.2, %v555
    %v572 = vsub.f32 0.2, %v556
    %v573 = vsub.f32 0.2, %v557
    %v574 = vsub.f32 0.2, %v558
    %v575 = vsub.f32 0.2, %v559
    %v576 = vsub.f32 0.2, %v560
    %v577 = vsub.f32 0.2, %v561
    %v578 = vsub.f32 0.2, %v562
    %v579 = vsub.f32 0.2, %v563
    %v580 = vsub.f32 0.2, %v564
    %v581 = vsub.f32 0.2, %v565
    %v582 = vmax.f32 %v566, 0.0
    %v583 = vmax.f32 %v567, 0.0
    %v584 = vmax.f32 %v568, 0.0
    %v585 = vmax.f32 %v569, 0.0
    %v586 = vmax.f32 %v570, 0.0
    %v587 = vmax.f32 %v571, 0.0
    %v588 = vmax.f32 %v572, 0.0
    %v589 = vmax.f32 %v573, 0.0
    %v590 = vmax.f32 %v574, 0.0
    %v591 = vmax.f32 %v575, 0.0
    %v592 = vmax.f32 %v576, 0.0
    %v593 = vmax.f32 %v577, 0.0
    %v594 = vmax.f32 %v578, 0.0
    %v595 = vmax.f32 %v579, 0.0
    %v596 = vmax.f32 %v580, 0.0
    %v597 = vmax.f32 %v581, 0.0
    %v598 = vadd.f32 %v582, 0.0001
    %v599 = vadd.f32 %v583, 0.0001
    %v600 = vadd.f32 %v584, 0.0001
    %v601 = vadd.f32 %v585, 0.0001
    %v602 = vadd.f32 %v586, 0.0001
    %v603 = vadd.f32 %v587, 0.0001
    %v604 = vadd.f32 %v588, 0.0001
    %v605 = vadd.f32 %v589, 0.0001
    %v606 = vadd.f32 %v590, 0.0001
    %v607 = vadd.f32 %v591, 0.0001
    %v608 = vadd.f32 %v592, 0.0001
    %v609 = vadd.f32 %v593, 0.0001
    %v610 = vadd.f32 %v594, 0.0001
    %v611 = vadd.f32 %v595, 0.0001
    %v612 = vadd.f32 %v596, 0.0001
    %v613 = vadd.f32 %v597, 0.0001
    %v614 = vrcp.pop %v598
    %v615 = vmul.f32 %v582, %v614
    %v616 = vrcp.pop %v599
    %v617 = vmul.f32 %v583, %v616
    %v618 = vrcp.pop %v600
    %v619 = vmul.f32 %v584, %v618
    %v620 = vrcp.pop %v601
    %v621 = vmul.f32 %v585, %v620
    %v622 = vrcp.pop %v602
    %v623 = vmul.f32 %v586, %v622
    %v624 = vrcp.pop %v603
    %v625 = vmul.f32 %v587, %v624
    %v626 = vrcp.pop %v604
    %v627 = vmul.f32 %v588, %v626
    %v628 = vrcp.pop %v605
    %v629 = vmul.f32 %v589, %v628
    %v630 = vrcp.pop %v606
    %v631 = vmul.f32 %v590, %v630
    %v632 = vrcp.pop %v607
    %v633 = vmul.f32 %v591, %v632
    %v634 = vrcp.pop %v608
    %v635 = vmul.f32 %v592, %v634
    %v636 = vrcp.pop %v609
    %v637 = vmul.f32 %v593, %v636
    %v638 = vrcp.pop %v610
    %v639 = vmul.f32 %v594, %v638
    %v640 = vrcp.pop %v611
    %v641 = vmul.f32 %v595, %v640
    %v642 = vrcp.pop %v612
    %v643 = vmul.f32 %v596, %v642
    %v644 = vrcp.pop %v613
    %v645 = vmul.f32 %v597, %v644
    %v646 = vsel %vm171, %v615, 0.0
    %v647 = vsel %vm171, %v617, 0.0
    %v648 = vadd.f32 %v646, %v647
    %v649 = vsel %vm171, %v619, 0.0
    %v650 = vadd.f32 %v648, %v649
    %v651 = vsel %vm171, %v621, 0.0
    %v652 = vadd.f32 %v650, %v651
    %v653 = vsel %vm171, %v623, 0.0
    %v654 = vadd.f32 %v652, %v653
    %v655 = vsel %vm171, %v625, 0.0
    %v656 = vadd.f32 %v654, %v655
    %v657 = vsel %vm171, %v627, 0.0
    %v658 = vadd.f32 %v656, %v657
    %v659 = vsel %vm171, %v629, 0.0
    %v660 = vadd.f32 %v658, %v659
    %v661 = vrot.slane %v660, 4
    %v662 = vadd.f32 %v660, %v661
    %v663 = vrot.slane %v662, 2
    %v664 = vadd.f32 %v662, %v663
    %v665 = vrot.slane %v664, 1
    %v666 = vadd.f32 %v664, %v665
    %v667 = vsel %vm171, %v631, 0.0
    %v668 = vsel %vm171, %v633, 0.0
    %v669 = vadd.f32 %v667, %v668
    %v670 = vsel %vm171, %v635, 0.0
    %v671 = vadd.f32 %v669, %v670
    %v672 = vsel %vm171, %v637, 0.0
    %v673 = vadd.f32 %v671, %v672
    %v674 = vsel %vm171, %v639, 0.0
    %v675 = vadd.f32 %v673, %v674
    %v676 = vsel %vm171, %v641, 0.0
    %v677 = vadd.f32 %v675, %v676
    %v678 = vsel %vm171, %v643, 0.0
    %v679 = vadd.f32 %v677, %v678
    %v680 = vsel %vm171, %v645, 0.0
    %v681 = vadd.f32 %v679, %v680
    %v682 = vrot.slane %v681, 4
    %v683 = vadd.f32 %v681, %v682
    %v684 = vrot.slane %v683, 2
    %v685 = vadd.f32 %v683, %v684
    %v686 = vrot.slane %v685, 1
    %v687 = vadd.f32 %v685, %v686
    %v688 = vsub.f32 %v512, %v666
    %v689 = vsub.f32 %v533, %v687
    %v692 = vsel %vm372, %v689, %v688
    %v694 = vadd.f32 %v379, %v692
    %695 = vst.msk [vmem:[%s378] sm:$0x3] %vm376, %v694
    // Predicated region
    $region18: #{tpu_custom_call.1} parent=1 // pred_check
      %p696 = pneg %p13
    $region19: #{tpu_custom_call.1} parent=1 // pred_check_branch
      %698 = sbr.rel (%p696) target = $region21
    $region20: #{tpu_custom_call.1} parent=1 // pred_region
      %v699 = vld [vmem:[#allocation2] sm:$0x3]
      %v700 = vmul.f32 %v699, %v699
      %v701 = vsel %vm376, %v700, 0.0
      %702 = vadd.xlane.f32.xlu0 %v701
      %v703 = vpop.xlane.xlu0 %702
      %v704 = vrot.slane %v703, 4
      %v705 = vadd.f32 %v703, %v704
      %v706 = vrot.slane %v705, 2
      %v707 = vadd.f32 %v705, %v706
      %v708 = vrot.slane %v707, 1
      %v709 = vadd.f32 %v707, %v708
      %s710 = vtos %v709
      %v711 = vstv %s710
      %v712 = vadd.f32 %v711, 0.0
      %v713 = vld [vmem:[%s378] sm:$0x3]
      %v714 = vmul.f32 %v713, %v713
      %v715 = vsel %vm376, %v714, 0.0
      %716 = vadd.xlane.f32.xlu0 %v715
      %v717 = vpop.xlane.xlu0 %716
      %v718 = vrot.slane %v717, 4
      %v719 = vadd.f32 %v717, %v718
      %v720 = vrot.slane %v719, 2
      %v721 = vadd.f32 %v719, %v720
      %v722 = vrot.slane %v721, 1
      %v723 = vadd.f32 %v721, %v722
      %s724 = vtos %v723
      %v725 = vstv %s724
      %v726 = vadd.f32 %v712, %v725
      %v727 = vld [vmem:[#allocation3] sm:$0x1]
      %v728 = vadd.f32 %v727, %v726
      %vm729 = vcmask 0
      %730 = vst.msk [vmem:[#allocation3] sm:$0x1] %vm729, %v728
    $region21: #{tpu_custom_call.1} parent=1 // pred_fallthru
      _
    // Predicated region
    $region22: #{tpu_custom_call.1} parent=1 // pred_check
      _
    $region23: #{tpu_custom_call.1} parent=1 // pred_check_branch
      %732 = sbr.rel (%p14) target = $region25
    $region24: #{tpu_custom_call.1} parent=1 // pred_region
      %v733 = vld [vmem:[#allocation3] sm:$0x1]
      %v734 = vmul.f32 %v733, 1.953125e-06
      %vm735 = vcmask 0
      %736 = vst.msk [vmem:[#allocation3] sm:$0x1] %vm735, %v734
    $region25: #{tpu_custom_call.1} parent=1 // pred_fallthru
      _
    // Predicated region
    $region26: #{tpu_custom_call.1} parent=1 // pred_check
      _
    $region27: #{tpu_custom_call.1} parent=1 // pred_check_branch
      %738 = sbr.rel (0) target = $region29
    $region28: #{tpu_custom_call.1} parent=1 // pred_region
      %s740 = ssub.s32 16, 16
      %741 = vsyncadd [#allocation4], %s740
      %s743 = sshll.u32 [#allocation3], 4
      %s744 = int_to_ptr.vmem [resolvable:$true] %s743
      %746 = dma.vmem_to_hbm [thread:$0]  %s744, 16, %s2, [#allocation4]
    $region29: #{tpu_custom_call.1} parent=1 // pred_fallthru
      _
    // Predicated region
    $region30: #{tpu_custom_call.1} parent=1 // pred_check
      _
    $region31: #{tpu_custom_call.1} parent=1 // pred_check_branch
      %748 = sbr.rel (0) target = $region33
    $region32: #{tpu_custom_call.1} parent=1 // pred_region
      %749 = dma.done [#allocation4], 16
    $region33: #{tpu_custom_call.1} parent=1 // pred_fallthru
      _
    %750 = vsyncpa [#allocation4], 1

</llo_original>
